<compile_context>
chip_gen: v5e
topology: v5e:2x2
jax: 0.10.0
libtpu: 0.0.40
codegen_flags: <defaults>
</compile_context>

<pallas_src>
import functools

import jax
import jax.numpy as jnp
from jax.experimental import pallas as pl
from jax.experimental.pallas import tpu as pltpu


def _return_last_kernel(x_ref, o_ref, *, lane_idx):
    """Gather lane `lane_idx` of every row; lay the result out lane-dense.

    x_ref: (r_block, s_block) tail window of the flattened (N*C, S) input,
           resident in VMEM; lane `lane_idx` of each row holds spatial S-1.
    o_ref: (1, r_block) lane-dense output tile.
    """
    r_block, _ = x_ref.shape
    chunk = 128
    n_full = r_block // chunk

    def emit(lo, hi):
        # (hi-lo, s_block) --XLU transpose--> (s_block, hi-lo); sublane row
        # `lane_idx` now holds the last spatial element of rows [lo, hi),
        # laid out along lanes -> unmasked, contiguous store.
        sub_t = x_ref[lo:hi, :].T
        o_ref[:, lo:hi] = sub_t[lane_idx:lane_idx + 1, :]

    for j in range(n_full):                       # static unroll
        emit(j * chunk, (j + 1) * chunk)
    if r_block % chunk:                           # remainder chunk (< 128 rows)
        emit(n_full * chunk, r_block)


def return_last(x: jax.Array) -> jax.Array:
    """Pallas equivalent of torch: x.flatten(start_dim=2)[..., -1]."""
    assert x.ndim >= 3, "ReturnLast kernel expects an (N, C, *spatial) input"
    n, c = x.shape[0], x.shape[1]
    rows = n * c

    # Flatten to (N*C, S); free for a contiguous NCHW-style array.
    x2d = x.reshape(rows, -1)
    s = x2d.shape[1]

    # Only DMA a 128-lane window containing the last spatial element.
    if s >= 128:
        s_block = 128
        s_tail = (s - 1) // 128        # block index of the window holding S-1
        lane_idx = (s - 1) % 128       # lane position of S-1 inside the window
    else:
        s_block = s                    # full-dim block is always legal
        s_tail = 0
        lane_idx = s - 1

    # Tile the independent row dimension: big enough to amortise per-step
    # overhead, small enough for VMEM (smallest on v7x); edge blocks are
    # handled by Pallas (padded loads / masked stores).
    r_block = rows if rows <= 1024 else 1024
    grid_r = pl.cdiv(rows, r_block)

    out2d = pl.pallas_call(
        functools.partial(_return_last_kernel, lane_idx=lane_idx),
        out_shape=jax.ShapeDtypeStruct((1, rows), x.dtype),
        grid_spec=pltpu.PrefetchScalarGridSpec(
            num_scalar_prefetch=0,
            grid=(grid_r,),
            in_specs=[pl.BlockSpec((r_block, s_block),
                                   lambda i: (i, s_tail))],
            out_specs=pl.BlockSpec((1, r_block), lambda i: (0, i)),
        ),
        compiler_params=pltpu.CompilerParams(
            dimension_semantics=("parallel",)),
    )(x2d)

    # (1, N*C) -> (N, C) reshape is free in XLA.
    return out2d.reshape(n, c)


if __name__ == "__main__":
    key = jax.random.PRNGKey(0)
    # small NCHW input consistent with a conv-style feature map
    x = jax.random.normal(key, (2, 4, 16, 16), dtype=jnp.float32)

    out = jax.block_until_ready(return_last(x))

    # reference check in plain JAX (pure gather -> exact equality expected)
    ref = x.reshape(2, 4, -1)[..., -1]
    assert out.shape == (2, 4)
    assert bool(jnp.array_equal(out, ref)), "mismatch vs reference"

    print("KERNEL_OK")
</pallas_src>

<mosaic_0001>
module attributes {stable_mosaic.version = 11 : i64} {
  func.func @_return_last_kernel(%arg0: i32, %arg1: memref<8x128xf32, #tpu.memory_space<vmem>>, %arg2: memref<1x8xf32, #tpu.memory_space<vmem>>) attributes {dimension_semantics = [#tpu.dimension_semantics<parallel>], iteration_bounds = array<i64: 1>, scalar_prefetch = 0 : i64, scratch_operands = 0 : i64, tpu.core_type = #tpu.core_type<tc>, window_params = [{transform_indices = @transform_0, window_bounds = array<i64: 8, 128>}, {transform_indices = @transform_1, window_bounds = array<i64: 1, 8>}]} {
    %c0 = arith.constant 0 : index
    %c0_0 = arith.constant 0 : index
    %0 = vector.load %arg1[%c0, %c0_0] : memref<8x128xf32, #tpu.memory_space<vmem>>, vector<8x128xf32>
    %1 = tpu.transpose %0, [1, 0] : vector<8x128xf32> -> vector<128x8xf32>
    %2 = vector.extract_strided_slice %1 {offsets = [127, 0], sizes = [1, 8], strides = [1, 1]} : vector<128x8xf32> to vector<1x8xf32>
    %c0_1 = arith.constant 0 : index
    %c0_2 = arith.constant 0 : index
    %3 = vector.load %arg2[%c0_1, %c0_2] : memref<1x8xf32, #tpu.memory_space<vmem>>, vector<1x8xf32>
    tpu.vector_store %arg2[%c0_1, %c0_2], %2 {strides = array<i32>} : memref<1x8xf32, #tpu.memory_space<vmem>>, vector<1x8xf32>,
    return
  }
  func.func @transform_0(%arg0: i32) -> (i32, i32) {
    %c1_i32 = arith.constant 1 : i32
    %c0_i32 = arith.constant 0 : i32
    return %arg0, %c1_i32 : i32, i32
  }
  func.func @transform_1(%arg0: i32) -> (i32, i32) {
    %c0_i32 = arith.constant 0 : i32
    %c0_i32_0 = arith.constant 0 : i32
    return %c0_i32, %arg0 : i32, i32
  }
}

</mosaic_0001>

<llo_original>
// kernel: tpu_custom_call.1
$region0: #{tpu_custom_call.1}
  #allocation0 [shape = 'u32[]', space=smem, size = 0x4, offset = 0x4, fixed_abs, tag = 'smem constant byte address 0x4 - core index']
  #allocation1 [shape = 'u32[72,128]{1,0:T(1,128)}', space=vmem, size = 0x9000, scoped, tag = 'internal scratch']
  %s0 = inlined_call_operand.hbm [shape: f32[8,256], index: 0, kind: input, shape index: {}]
  %s1 = inlined_call_operand.hbm [shape: f32[1,8], index: 1, kind: output, shape index: {}]
  %s2 = sld [smem:[#allocation0]]
  $region18: #{tpu_custom_call.1} parent=0
    _
  %s4 = ssub.s32 1, %s2
  %s5 = scalar_select 0, %s4, %s2
  $region1: #{tpu_custom_call.1} parent=0
    #allocation2 [shape = 'u8[4096]{0}', space=vmem, size = 0x1000, scoped, tag = 'input window, operand 0, single buffered']
    #allocation3 [shape = 's32[1]{0}', space=sflag, size = 0x4, scoped, tag = 'scoped memory for tpu_custom_call.1']
    #allocation4 [shape = 's32[1]{0}', space=sflag, size = 0x4, scoped, tag = 'scoped memory for tpu_custom_call.1']
    #allocation5 [shape = 'u8[512]{0}', space=vmem, size = 0x400, scoped, tag = 'output window, operand 0, single buffered']
    %6 = vsyncpa [#allocation3], 0
    %7 = vsyncpa [#allocation4], 0
    // Predicated region
    $region2: #{tpu_custom_call.1} parent=1 // pred_check
      _
    $region3: #{tpu_custom_call.1} parent=1 // pred_check_branch
      %9 = sbr.rel (0) target = $region5
    $region4: #{tpu_custom_call.1} parent=1 // pred_region
      %11 = vsyncadd [#allocation3], 0
      %s12 = scalar_lea.hbm %s0, 8
      %s14 = sshll.u32 %s12, 4
      %s15 = int_to_ptr.hbm [resolvable:$true] %s14
      %s16 = sshll.u32 [#allocation2], 4
      %s17 = int_to_ptr.vmem [resolvable:$true] %s16
      %19 = dma.hbm_to_vmem [thread:$0]  %s15, 128, %s17, [#allocation3]
    $region5: #{tpu_custom_call.1} parent=1 // pred_fallthru
      _
    // Predicated region
    $region6: #{tpu_custom_call.1} parent=1 // pred_check
      _
    $region7: #{tpu_custom_call.1} parent=1 // pred_check_branch
      %21 = sbr.rel (0) target = $region9
    $region8: #{tpu_custom_call.1} parent=1 // pred_region
      %23 = dma.done [#allocation3], 128
    $region9: #{tpu_custom_call.1} parent=1 // pred_fallthru
      _
    %v24 = vld [vmem:[#allocation2] sm:$0xff]
    %25 = vxpose.xlu0.b32.start [1/16] %v24, 128
    %26 = vxpose.xlu0.b32.cont [2/16] 0.0, 128
    %27 = vxpose.xlu0.b32.cont [3/16] 0.0, 128
    %28 = vxpose.xlu0.b32.cont [4/16] 0.0, 128
    %29 = vxpose.xlu0.b32.cont [5/16] 0.0, 128
    %30 = vxpose.xlu0.b32.cont [6/16] 0.0, 128
    %31 = vxpose.xlu0.b32.cont [7/16] 0.0, 128
    %32 = vxpose.xlu0.b32.cont [8/16] 0.0, 128
    %33 = vxpose.xlu0.b32.cont [9/16] 0.0, 128
    %34 = vxpose.xlu0.b32.cont [10/16] 0.0, 128
    %35 = vxpose.xlu0.b32.cont [11/16] 0.0, 128
    %36 = vxpose.xlu0.b32.cont [12/16] 0.0, 128
    %37 = vxpose.xlu0.b32.cont [13/16] 0.0, 128
    %38 = vxpose.xlu0.b32.cont [14/16] 0.0, 128
    %39 = vxpose.xlu0.b32.cont [15/16] 0.0, 128
    %40 = vxpose.xlu0.b32.end [16/16] 0.0, 128
    %v41 = vpop.trf.xlu0
    %v42 = vpop.trf.xlu0
    %v43 = vpop.trf.xlu0
    %v44 = vpop.trf.xlu0
    %v45 = vpop.trf.xlu0
    %v46 = vpop.trf.xlu0
    %v47 = vpop.trf.xlu0
    %v48 = vpop.trf.xlu0
    %v49 = vpop.trf.xlu0
    %v50 = vpop.trf.xlu0
    %v51 = vpop.trf.xlu0
    %v52 = vpop.trf.xlu0
    %v53 = vpop.trf.xlu0
    %v54 = vpop.trf.xlu0
    %v55 = vpop.trf.xlu0
    %v56 = vpop.trf.xlu0
    %vm57 = vcmask 64519
    %58 = vst.msk [vmem:[#allocation5 - $0x7] sm:$0x80] %vm57, %v56
    // Predicated region
    $region10: #{tpu_custom_call.1} parent=1 // pred_check
      _
    $region11: #{tpu_custom_call.1} parent=1 // pred_check_branch
      %60 = sbr.rel (0) target = $region13
    $region12: #{tpu_custom_call.1} parent=1 // pred_region
      %62 = vsyncadd [#allocation4], 0
      %s64 = sshll.u32 [#allocation5], 4
      %s65 = int_to_ptr.vmem [resolvable:$true] %s64
      %s66 = sshll.u32 %s1, 4
      %s67 = int_to_ptr.hbm [resolvable:$true] %s66
      %69 = dma.vmem_to_hbm [thread:$0]  %s65, 16, %s67, [#allocation4]
    $region13: #{tpu_custom_call.1} parent=1 // pred_fallthru
      _
    // Predicated region
    $region14: #{tpu_custom_call.1} parent=1 // pred_check
      _
    $region15: #{tpu_custom_call.1} parent=1 // pred_check_branch
      %71 = sbr.rel (0) target = $region17
    $region16: #{tpu_custom_call.1} parent=1 // pred_region
      %73 = dma.done [#allocation4], 16
    $region17: #{tpu_custom_call.1} parent=1 // pred_fallthru
      _
    %74 = vsyncpa [#allocation3], 1
    %75 = vsyncpa [#allocation4], 1

</llo_original>
